<compile_context>
chip_gen: v7x
topology: tpu7x:2x2x1
jax: 0.10.0
libtpu: 0.0.40
codegen_flags: <defaults>
</compile_context>

<pallas_src>
import functools

import jax
import jax.numpy as jnp
from jax.experimental import pallas as pl
from jax.experimental.pallas import tpu as pltpu

LANE = 128
SUBLANE = 8
VMEM_BUDGET_BYTES = 16 * 1024 * 1024   # conservative working-set budget (fits v5e scoped default)
VMEM_LIMIT_BYTES = 32 * 1024 * 1024    # explicit scoped-VMEM limit; valid on v5e/v6e/v7x

_SINGLE_BUFFER_OK = True  # flipped off once if pl.Buffered(1) is unsupported


def _round_up(n: int, m: int) -> int:
    return ((n + m - 1) // m) * m


def _pad_classes(c: int) -> int:
    # Lane-dense class dim. 128-granular for small heads (minimises padded HBM
    # traffic); 256-granular once the head is wide enough to feed a full
    # 256-wide v6e/v7x MXU pass.
    return _round_up(c, 128) if c <= 128 else _round_up(c, 256)


def _derive_batch_tile(batch, feat, c_pad, x_itemsize, w_itemsize):
    """Largest batch tile whose double-buffered working set fits the VMEM budget."""
    f_lanes = _round_up(max(feat, 1), LANE)      # x tile: feature dim padded to lanes
    f_sub = _round_up(max(feat, 1), SUBLANE)     # w_t: feature dim padded to sublanes
    # Residents (weight + bias) counted double-buffered so the plan stays safe even
    # when the single-buffered (pl.Buffered(1)) path is unavailable.
    resident = 2 * (f_sub * c_pad * w_itemsize + SUBLANE * c_pad * 4)
    per_row = 2 * (f_lanes * x_itemsize + c_pad * 4)   # double-buffered x tile + out tile
    avail = VMEM_BUDGET_BYTES - resident
    # TODO(synk): for very large F/C (resident weight > budget) add a reduction grid
    # axis over F and/or a class-tile grid axis instead of keeping W fully resident.
    tile = max(SUBLANE, avail // per_row) if avail > 0 else SUBLANE
    tile = min(tile, 4096)
    if tile >= batch:
        return batch                                   # one block over the whole batch
    return max(SUBLANE, (tile // SUBLANE) * SUBLANE)   # multiple of 8; last block ragged


def ridge_logreg_kernel(x_ref, wt_ref, b_ref, scale_ref, o_ref):
    # x_ref: [TM, F] batch tile; wt_ref: [F, C_pad] resident RHS (K sublanes, N lanes);
    # b_ref: [1, C_pad] f32; scale_ref: SMEM f32[1]; o_ref: [TM, C_pad] f32.
    scores = jnp.dot(x_ref[...], wt_ref[...], preferred_element_type=jnp.float32)
    o_ref[...] = (scale_ref[0] * (scores + b_ref[...])).astype(o_ref.dtype)


def _resident_spec(block_shape, index_map, single_buffer):
    if single_buffer:
        # Constant index_map -> DMA'd once; Buffered(1) drops the useless second buffer.
        return pl.BlockSpec(block_shape, index_map, pipeline_mode=pl.Buffered(1))
    return pl.BlockSpec(block_shape, index_map)


@functools.partial(jax.jit, static_argnames=("tm", "single_buffer_resident"))
def _forward_padded(x, w_t, b_row, scale, *, tm, single_buffer_resident):
    B, F = x.shape
    _, C_pad = w_t.shape
    nb = pl.cdiv(B, tm)

    cost = pl.CostEstimate(
        flops=2 * B * F * C_pad,
        transcendentals=0,
        bytes_accessed=(B * F * x.dtype.itemsize
                        + F * C_pad * w_t.dtype.itemsize
                        + (C_pad + B * C_pad) * 4),
    )

    return pl.pallas_call(
        ridge_logreg_kernel,
        out_shape=jax.ShapeDtypeStruct((B, C_pad), jnp.float32),
        grid_spec=pltpu.PrefetchScalarGridSpec(
            num_scalar_prefetch=0,
            grid=(nb,),
            in_specs=[
                pl.BlockSpec((tm, F), lambda i: (i, 0)),   # x: pipelined over batch tiles
                _resident_spec((F, C_pad), lambda i: (0, 0), single_buffer_resident),  # W^T resident
                _resident_spec((1, C_pad), lambda i: (0, 0), single_buffer_resident),  # bias resident
                pl.BlockSpec(memory_space=pltpu.SMEM),      # scale_factor scalar
            ],
            out_specs=pl.BlockSpec((tm, C_pad), lambda i: (i, 0)),
        ),
        compiler_params=pltpu.CompilerParams(
            # Batch tiles fully independent -> shard across TCs on v7x; no-op on v5e/v6e.
            dimension_semantics=("parallel",),
            vmem_limit_bytes=VMEM_LIMIT_BYTES,
        ),
        cost_estimate=cost,
    )(x, w_t, b_row, scale)


def ridge_logistic_regression_forward(x, weight, bias, scale_factor, *, compute_dtype=None):
    """scores = scale_factor * (x @ weight.T + bias).

    x: [B, F]; weight: [C, F] (nn.Linear layout); bias: [C]; scale_factor: [1].
    compute_dtype (e.g. jnp.bfloat16) halves x/W HBM traffic; accumulation stays f32.
    Returns [B, C] float32."""
    global _SINGLE_BUFFER_OK
    B, F = x.shape
    C, _ = weight.shape
    C_pad = _pad_classes(C)

    if compute_dtype is not None:
        x = x.astype(compute_dtype)
        weight = weight.astype(compute_dtype)

    # MXU-native, lane-dense RHS: [F, C_pad] (K on sublanes, N on lanes).
    w_t = jnp.pad(weight.T, ((0, 0), (0, C_pad - C)))
    b_row = jnp.pad(bias.astype(jnp.float32), (0, C_pad - C)).reshape(1, C_pad)
    scale = scale_factor.astype(jnp.float32).reshape(1)

    tm = _derive_batch_tile(B, F, C_pad, x.dtype.itemsize, w_t.dtype.itemsize)

    if _SINGLE_BUFFER_OK:
        try:
            out = _forward_padded(x, w_t, b_row, scale, tm=tm, single_buffer_resident=True)
        except Exception:
            # JAX version without BlockSpec(pipeline_mode=pl.Buffered(1)) support.
            _SINGLE_BUFFER_OK = False
            out = _forward_padded(x, w_t, b_row, scale, tm=tm, single_buffer_resident=False)
    else:
        out = _forward_padded(x, w_t, b_row, scale, tm=tm, single_buffer_resident=False)

    return out[:, :C]


def reference_forward(x, weight, bias, scale_factor):
    return scale_factor[0] * (x @ weight.T + bias[None, :])


if __name__ == "__main__":
    # Small shapes consistent with the module: feature_dim=32, num_class=10, batch=8
    feature_dim = 32
    num_class = 10
    batch = 8

    key = jax.random.PRNGKey(0)
    kx, kw, kb = jax.random.split(key, 3)

    x = jax.random.normal(kx, (batch, feature_dim), dtype=jnp.float32)
    # deterministic parameter init (mimics nn.Linear uniform(-1/sqrt(F), 1/sqrt(F)))
    bound = 1.0 / (feature_dim ** 0.5)
    weight = jax.random.uniform(kw, (num_class, feature_dim), jnp.float32, -bound, bound)
    bias = jax.random.uniform(kb, (num_class,), jnp.float32, -bound, bound)
    scale_factor = jnp.array([30.0], dtype=jnp.float32)

    out = ridge_logistic_regression_forward(x, weight, bias, scale_factor)
    out = jax.block_until_ready(out)

    ref = reference_forward(x, weight, bias, scale_factor)
    assert out.shape == (batch, num_class), out.shape
    assert jnp.allclose(out, ref, atol=1e-4, rtol=1e-4), "mismatch vs reference"

    print("KERNEL_OK")
</pallas_src>

<mosaic_0001>
module attributes {stable_mosaic.version = 11 : i64} {
  func.func @ridge_logreg_kernel(%arg0: i32, %arg1: memref<8x32xf32, #tpu.memory_space<vmem>>, %arg2: memref<32x128xf32, #tpu.memory_space<vmem>>, %arg3: memref<1x128xf32, #tpu.memory_space<vmem>>, %arg4: memref<1xf32, #tpu.memory_space<smem>>, %arg5: memref<8x128xf32, #tpu.memory_space<vmem>>) attributes {dimension_semantics = [#tpu.dimension_semantics<parallel>], iteration_bounds = array<i64: 1>, scalar_prefetch = 0 : i64, scratch_operands = 0 : i64, tpu.core_type = #tpu.core_type<tc>, window_params = [{transform_indices = @transform_0, window_bounds = array<i64: 8, 32>}, {pipeline_mode = #tpu.pipeline_mode<synchronous>, transform_indices = @transform_1, window_bounds = array<i64: 32, 128>}, {pipeline_mode = #tpu.pipeline_mode<synchronous>, transform_indices = @transform_2, window_bounds = array<i64: 1, 128>}, {transform_indices = @transform_3, window_bounds = array<i64: 1>}, {transform_indices = @transform_4, window_bounds = array<i64: 8, 128>}]} {
    %c0 = arith.constant 0 : index
    %c0_0 = arith.constant 0 : index
    %0 = vector.load %arg1[%c0, %c0_0] : memref<8x32xf32, #tpu.memory_space<vmem>>, vector<8x32xf32>
    %c0_1 = arith.constant 0 : index
    %c0_2 = arith.constant 0 : index
    %1 = vector.load %arg2[%c0_1, %c0_2] : memref<32x128xf32, #tpu.memory_space<vmem>>, vector<32x128xf32>
    %cst = arith.constant dense<0.000000e+00> : vector<8x128xf32>
    %2 = tpu.matmul %0, %1, %cst {dimension_numbers = #tpu.dot_dimension_numbers<[1], [0], [0], [1], [0, 0, 1, 1], [], []>} : vector<8x32xf32>, vector<32x128xf32>, vector<8x128xf32> -> vector<8x128xf32>
    %c0_3 = arith.constant 0 : index
    %3 = memref.load %arg4[%c0_3] : memref<1xf32, #tpu.memory_space<smem>>
    %c0_4 = arith.constant 0 : index
    %c0_5 = arith.constant 0 : index
    %4 = vector.load %arg3[%c0_4, %c0_5] : memref<1x128xf32, #tpu.memory_space<vmem>>, vector<1x128xf32>
    %5 = vector.broadcast %4 : vector<1x128xf32> to vector<8x128xf32>
    %6 = arith.addf %2, %5 : vector<8x128xf32>
    %7 = vector.broadcast %3 : f32 to vector<8x128xf32>
    %8 = arith.mulf %7, %6 : vector<8x128xf32>
    %c0_6 = arith.constant 0 : index
    %c0_7 = arith.constant 0 : index
    %9 = vector.load %arg5[%c0_6, %c0_7] : memref<8x128xf32, #tpu.memory_space<vmem>>, vector<8x128xf32>
    tpu.vector_store %arg5[%c0_6, %c0_7], %8 {strides = array<i32>} : memref<8x128xf32, #tpu.memory_space<vmem>>, vector<8x128xf32>,
    return
  }
  func.func @transform_0(%arg0: i32) -> (i32, i32) {
    %c0_i32 = arith.constant 0 : i32
    %c0_i32_0 = arith.constant 0 : i32
    return %arg0, %c0_i32 : i32, i32
  }
  func.func @transform_1(%arg0: i32) -> (i32, i32) {
    %c0_i32 = arith.constant 0 : i32
    %c0_i32_0 = arith.constant 0 : i32
    %c0_i32_1 = arith.constant 0 : i32
    return %c0_i32, %c0_i32_0 : i32, i32
  }
  func.func @transform_2(%arg0: i32) -> (i32, i32) {
    %c0_i32 = arith.constant 0 : i32
    %c0_i32_0 = arith.constant 0 : i32
    %c0_i32_1 = arith.constant 0 : i32
    return %c0_i32, %c0_i32_0 : i32, i32
  }
  func.func @transform_3(%arg0: i32) -> i32 {
    %c0_i32 = arith.constant 0 : i32
    %c0_i32_0 = arith.constant 0 : i32
    return %c0_i32 : i32
  }
  func.func @transform_4(%arg0: i32) -> (i32, i32) {
    %c0_i32 = arith.constant 0 : i32
    %c0_i32_0 = arith.constant 0 : i32
    return %arg0, %c0_i32 : i32, i32
  }
}

module attributes {stable_mosaic.version = 11 : i64} {
  func.func @ridge_logreg_kernel(%arg0: i32, %arg1: memref<8x32xf32, #tpu.memory_space<vmem>>, %arg2: memref<32x128xf32, #tpu.memory_space<vmem>>, %arg3: memref<1x128xf32, #tpu.memory_space<vmem>>, %arg4: memref<1xf32, #tpu.memory_space<smem>>, %arg5: memref<8x128xf32, #tpu.memory_space<vmem>>) attributes {dimension_semantics = [#tpu.dimension_semantics<parallel>], iteration_bounds = array<i64: 1>, scalar_prefetch = 0 : i64, scratch_operands = 0 : i64, tpu.core_type = #tpu.core_type<tc>, window_params = [{transform_indices = @transform_0, window_bounds = array<i64: 8, 32>}, {pipeline_mode = #tpu.pipeline_mode<synchronous>, transform_indices = @transform_1, window_bounds = array<i64: 32, 128>}, {pipeline_mode = #tpu.pipeline_mode<synchronous>, transform_indices = @transform_2, window_bounds = array<i64: 1, 128>}, {transform_indices = @transform_3, window_bounds = array<i64: 1>}, {transform_indices = @transform_4, window_bounds = array<i64: 8, 128>}]} {
    %c0 = arith.constant 0 : index
    %c0_0 = arith.constant 0 : index
    %0 = vector.load %arg1[%c0, %c0_0] : memref<8x32xf32, #tpu.memory_space<vmem>>, vector<8x32xf32>
    %c0_1 = arith.constant 0 : index
    %c0_2 = arith.constant 0 : index
    %1 = vector.load %arg2[%c0_1, %c0_2] : memref<32x128xf32, #tpu.memory_space<vmem>>, vector<32x128xf32>
    %cst = arith.constant dense<0.000000e+00> : vector<8x128xf32>
    %2 = tpu.matmul %0, %1, %cst {dimension_numbers = #tpu.dot_dimension_numbers<[1], [0], [0], [1], [0, 0, 1, 1], [], []>} : vector<8x32xf32>, vector<32x128xf32>, vector<8x128xf32> -> vector<8x128xf32>
    %c0_3 = arith.constant 0 : index
    %3 = memref.load %arg4[%c0_3] : memref<1xf32, #tpu.memory_space<smem>>
    %c0_4 = arith.constant 0 : index
    %c0_5 = arith.constant 0 : index
    %4 = vector.load %arg3[%c0_4, %c0_5] : memref<1x128xf32, #tpu.memory_space<vmem>>, vector<1x128xf32>
    %5 = vector.broadcast %4 : vector<1x128xf32> to vector<8x128xf32>
    %6 = arith.addf %2, %5 : vector<8x128xf32>
    %7 = vector.broadcast %3 : f32 to vector<8x128xf32>
    %8 = arith.mulf %7, %6 : vector<8x128xf32>
    %c0_6 = arith.constant 0 : index
    %c0_7 = arith.constant 0 : index
    %9 = vector.load %arg5[%c0_6, %c0_7] : memref<8x128xf32, #tpu.memory_space<vmem>>, vector<8x128xf32>
    tpu.vector_store %arg5[%c0_6, %c0_7], %8 {strides = array<i32>} : memref<8x128xf32, #tpu.memory_space<vmem>>, vector<8x128xf32>,
    return
  }
  func.func @transform_0(%arg0: i32) -> (i32, i32) {
    %c0_i32 = arith.constant 0 : i32
    %c0_i32_0 = arith.constant 0 : i32
    return %arg0, %c0_i32 : i32, i32
  }
  func.func @transform_1(%arg0: i32) -> (i32, i32) {
    %c0_i32 = arith.constant 0 : i32
    %c0_i32_0 = arith.constant 0 : i32
    %c0_i32_1 = arith.constant 0 : i32
    return %c0_i32, %c0_i32_0 : i32, i32
  }
  func.func @transform_2(%arg0: i32) -> (i32, i32) {
    %c0_i32 = arith.constant 0 : i32
    %c0_i32_0 = arith.constant 0 : i32
    %c0_i32_1 = arith.constant 0 : i32
    return %c0_i32, %c0_i32_0 : i32, i32
  }
  func.func @transform_3(%arg0: i32) -> i32 {
    %c0_i32 = arith.constant 0 : i32
    %c0_i32_0 = arith.constant 0 : i32
    return %c0_i32 : i32
  }
  func.func @transform_4(%arg0: i32) -> (i32, i32) {
    %c0_i32 = arith.constant 0 : i32
    %c0_i32_0 = arith.constant 0 : i32
    return %arg0, %c0_i32 : i32, i32
  }
}

</mosaic_0001>

<llo_original>
// kernel: _forward_padded.1
$region0: #{_forward_padded.1}
  #allocation0 [shape = 'u32[]', space=smem, size = 0x4, offset = 0x4, fixed_abs, tag = 'smem constant byte address 0x4 - core index']
  #allocation1 [shape = 'u32[144,128]{1,0:T(1,128)}', space=vmem, size = 0x12000, scoped, tag = 'internal scratch']
  #allocation2 [shape = 'f32[1]{0:T(128)S(6)}', space=smem, size = 0x200, scoped, tag = 'scoped memory for _forward_padded.1']
  %s0 = inlined_call_operand.hbm [shape: f32[8,32], index: 0, kind: input, shape index: {}]
  %s1 = inlined_call_operand.hbm [shape: f32[32,128], index: 1, kind: input, shape index: {}]
  %s2 = inlined_call_operand.vmem [shape: f32[1,128], index: 2, kind: input, shape index: {}]
  %s3 = inlined_call_operand.<no memory space> [shape: f32[1], index: 3, kind: input, shape index: {}]
  %s4 = inlined_call_operand.hbm [shape: f32[8,128], index: 4, kind: output, shape index: {}]
  %s5 = sld [smem:[#allocation0]]
  $region34: #{_forward_padded.1} parent=0
    _
  %s7 = ssub.s32 1, %s5
  %s8 = scalar_select 0, %s7, %s5
  %9 = sst [smem:[#allocation2]] %s3
  $region1: #{_forward_padded.1} parent=0
    #allocation3 [shape = 'u8[4096]{0}', space=vmem, size = 0x1000, scoped, tag = 'input window, operand 0, single buffered']
    #allocation4 [shape = 's32[1]{0}', space=sflag, size = 0x4, scoped, tag = 'scoped memory for _forward_padded.1']
    #allocation5 [shape = 's32[1]{0}', space=sflag, size = 0x4, scoped, tag = 'scoped memory for _forward_padded.1']
    #allocation6 [shape = 'u8[16384]{0}', space=vmem, size = 0x4000, scoped, tag = 'input window, operand 1, single buffered']
    #allocation7 [shape = 's32[1]{0}', space=sflag, size = 0x4, scoped, tag = 'scoped memory for _forward_padded.1']
    #allocation8 [shape = 'u8[4096]{0}', space=vmem, size = 0x1000, scoped, tag = 'output window, operand 0, single buffered']
    %10 = vsyncpa [#allocation4], 0
    %11 = vsyncpa [#allocation7], 0
    %12 = vsyncpa [#allocation5], 0
    // Predicated region
    $region2: #{_forward_padded.1} parent=1 // pred_check
      _
    $region3: #{_forward_padded.1} parent=1 // pred_check_branch
      %14 = sbr.rel (0) target = $region5
    $region4: #{_forward_padded.1} parent=1 // pred_region
      %s16 = ssub.s32 128, 128
      %17 = vsyncadd [#allocation4], %s16
      %s19 = sshll.u32 [#allocation3], 4
      %s20 = int_to_ptr.vmem [resolvable:$true] %s19
      %22 = dma.hbm_to_vmem [thread:$0]  %s0, 128, %s20, [#allocation4]
    $region5: #{_forward_padded.1} parent=1 // pred_fallthru
      _
    // Predicated region
    $region6: #{_forward_padded.1} parent=1 // pred_check
      _
    $region7: #{_forward_padded.1} parent=1 // pred_check_branch
      %24 = sbr.rel (0) target = $region9
    $region8: #{_forward_padded.1} parent=1 // pred_region
      %s26 = ssub.s32 512, 512
      %27 = vsyncadd [#allocation7], %s26
      %s28 = sshll.u32 [#allocation6], 4
      %s29 = int_to_ptr.vmem [resolvable:$true] %s28
      %34 = dma.hbm_to_vmem [thread:$0]  %s1, 512, %s29, [#allocation7], 128, 128, 8
    $region9: #{_forward_padded.1} parent=1 // pred_fallthru
      _
    // Predicated region
    $region10: #{_forward_padded.1} parent=1 // pred_check
      _
    $region11: #{_forward_padded.1} parent=1 // pred_check_branch
      %36 = sbr.rel (0) target = $region13
    $region12: #{_forward_padded.1} parent=1 // pred_region
      _
    $region13: #{_forward_padded.1} parent=1 // pred_fallthru
      _
    // Predicated region
    $region14: #{_forward_padded.1} parent=1 // pred_check
      _
    $region15: #{_forward_padded.1} parent=1 // pred_check_branch
      %38 = sbr.rel (0) target = $region17
    $region16: #{_forward_padded.1} parent=1 // pred_region
      _
    $region17: #{_forward_padded.1} parent=1 // pred_fallthru
      _
    // Predicated region
    $region18: #{_forward_padded.1} parent=1 // pred_check
      _
    $region19: #{_forward_padded.1} parent=1 // pred_check_branch
      %40 = sbr.rel (0) target = $region21
    $region20: #{_forward_padded.1} parent=1 // pred_region
      %41 = dma.done [#allocation4], 128
    $region21: #{_forward_padded.1} parent=1 // pred_fallthru
      _
    // Predicated region
    $region22: #{_forward_padded.1} parent=1 // pred_check
      _
    $region23: #{_forward_padded.1} parent=1 // pred_check_branch
      %43 = sbr.rel (0) target = $region25
    $region24: #{_forward_padded.1} parent=1 // pred_region
      %44 = dma.done [#allocation7], 512
    $region25: #{_forward_padded.1} parent=1 // pred_fallthru
      _
    %v45 = vld [vmem:[#allocation3] sm:$0xff]
    %v46 = vld [vmem:[#allocation6] sm:$0xff]
    %v47 = vld [vmem:[#allocation6 + $0x8] sm:$0xff]
    %v48 = vld [vmem:[#allocation6 + $0x10] sm:$0xff]
    %v49 = vld [vmem:[#allocation6 + $0x18] sm:$0xff]
    %s50 = sld [smem:[#allocation2]]
    %v51 = vld [vmem:[%s2] sm:$0x1]
    %v53 = vlaneseq
    %v54 = vshrl.u32 %v53, 7
    %v55 = vsub.s32 0, %v54
    %v56 = vrot.slane %v51, %v55
    %vm58 = vcmask 261120
    %v60 = vsel %vm58, %v45, 0
    %62 = vmatprep.subr.mxu0 0.0
    %63 = vmatpush1.msra.mxu0 %v46
    %64 = vmatprep.subr.mxu0 0.0
    %65 = vmatpush1.msra.mxu0 %v47
    %66 = vmatprep.subr.mxu0 0.0
    %67 = vmatpush1.msra.mxu0 %v48
    %68 = vmatprep.subr.mxu0 0.0
    %69 = vmatpush1.msra.mxu0 %v49
    %70 = vmatprep.subr.mxu0 0.0
    %71 = vmatpush1.msra.mxu0 0.0
    %72 = vmatprep.subr.mxu0 0.0
    %73 = vmatpush1.msra.mxu0 0.0
    %74 = vmatprep.subr.mxu0 0.0
    %75 = vmatpush1.msra.mxu0 0.0
    %76 = vmatprep.subr.mxu0 0.0
    %77 = vmatpush1.msra.mxu0 0.0
    %78 = vmatprep.subr.mxu0 0.0
    %79 = vmatpush1.msra.mxu0 0.0
    %80 = vmatprep.subr.mxu0 0.0
    %81 = vmatpush1.msra.mxu0 0.0
    %82 = vmatprep.subr.mxu0 0.0
    %83 = vmatpush1.msra.mxu0 0.0
    %84 = vmatprep.subr.mxu0 0.0
    %85 = vmatpush1.msra.mxu0 0.0
    %86 = vmatprep.subr.mxu0 0.0
    %87 = vmatpush1.msra.mxu0 0.0
    %88 = vmatprep.subr.mxu0 0.0
    %89 = vmatpush1.msra.mxu0 0.0
    %90 = vmatprep.subr.mxu0 0.0
    %91 = vmatpush1.msra.mxu0 0.0
    %92 = vmatprep.subr.mxu0 0.0
    %93 = vmatpush1.msra.mxu0 0.0
    %94 = vmatprep.subr.mxu0 0.0
    %95 = vmatpush1.msra.mxu0 0.0
    %96 = vmatprep.subr.mxu0 0.0
    %97 = vmatpush1.msra.mxu0 0.0
    %98 = vmatprep.subr.mxu0 0.0
    %99 = vmatpush1.msra.mxu0 0.0
    %100 = vmatprep.subr.mxu0 0.0
    %101 = vmatpush1.msra.mxu0 0.0
    %102 = vmatprep.subr.mxu0 0.0
    %103 = vmatpush1.msra.mxu0 0.0
    %104 = vmatprep.subr.mxu0 0.0
    %105 = vmatpush1.msra.mxu0 0.0
    %106 = vmatprep.subr.mxu0 0.0
    %107 = vmatpush1.msra.mxu0 0.0
    %108 = vmatprep.subr.mxu0 0.0
    %109 = vmatpush1.msra.mxu0 0.0
    %110 = vmatprep.subr.mxu0 0.0
    %111 = vmatpush1.msra.mxu0 0.0
    %112 = vmatprep.subr.mxu0 0.0
    %113 = vmatpush1.msra.mxu0 0.0
    %114 = vmatprep.subr.mxu0 0.0
    %115 = vmatpush1.msra.mxu0 0.0
    %116 = vmatprep.subr.mxu0 0.0
    %117 = vmatpush1.msra.mxu0 0.0
    %118 = vmatprep.subr.mxu0 0.0
    %119 = vmatpush1.msra.mxu0 0.0
    %120 = vmatprep.subr.mxu0 0.0
    %121 = vmatpush1.msra.mxu0 0.0
    %122 = vmatprep.subr.mxu0 0.0
    %123 = vmatpush1.msra.mxu0 0.0
    %124 = vmatprep.subr.mxu0 0.0
    %125 = vmatpush1.msra.mxu0 0.0
    %126 = vmatprep.mubr.f32.mxu0 0.0
    %127 = vmatmul.mubr.f32.gmra.mrb[0].mxu0 %v60
    %v128 = vpop.f32.mrb[0].mxu0
    %v129 = vadd.f32 %v56, %v128
    %v130 = vpop.f32.mrb[0].mxu0
    %131 = vdwg.mxu0
    %v132 = vstv %s50
    %v133 = vmul.f32 %v132, %v129
    %134 = vst [vmem:[#allocation8] sm:$0xff] %v133
    // Predicated region
    $region26: #{_forward_padded.1} parent=1 // pred_check
      _
    $region27: #{_forward_padded.1} parent=1 // pred_check_branch
      %136 = sbr.rel (0) target = $region29
    $region28: #{_forward_padded.1} parent=1 // pred_region
      %s138 = ssub.s32 128, 128
      %139 = vsyncadd [#allocation5], %s138
      %s141 = sshll.u32 [#allocation8], 4
      %s142 = int_to_ptr.vmem [resolvable:$true] %s141
      %144 = dma.vmem_to_hbm [thread:$0]  %s142, 128, %s4, [#allocation5]
    $region29: #{_forward_padded.1} parent=1 // pred_fallthru
      _
    // Predicated region
    $region30: #{_forward_padded.1} parent=1 // pred_check
      _
    $region31: #{_forward_padded.1} parent=1 // pred_check_branch
      %146 = sbr.rel (0) target = $region33
    $region32: #{_forward_padded.1} parent=1 // pred_region
      %147 = dma.done [#allocation5], 128
    $region33: #{_forward_padded.1} parent=1 // pred_fallthru
      _
    %148 = vsyncpa [#allocation4], 1
    %149 = vsyncpa [#allocation7], 1
    %150 = vsyncpa [#allocation5], 1

// kernel: _forward_padded.1
$region0: #{_forward_padded.1}
  #allocation0 [shape = 'u32[]', space=smem, size = 0x4, offset = 0x4, fixed_abs, tag = 'smem constant byte address 0x4 - core index']
  #allocation1 [shape = 'u32[144,128]{1,0:T(1,128)}', space=vmem, size = 0x12000, scoped, tag = 'internal scratch']
  #allocation2 [shape = 'f32[1]{0:T(128)S(6)}', space=smem, size = 0x200, scoped, tag = 'scoped memory for _forward_padded.1']
  %s0 = inlined_call_operand.hbm [shape: f32[8,32], index: 0, kind: input, shape index: {}]
  %s1 = inlined_call_operand.hbm [shape: f32[32,128], index: 1, kind: input, shape index: {}]
  %s2 = inlined_call_operand.vmem [shape: f32[1,128], index: 2, kind: input, shape index: {}]
  %s3 = inlined_call_operand.<no memory space> [shape: f32[1], index: 3, kind: input, shape index: {}]
  %s4 = inlined_call_operand.hbm [shape: f32[8,128], index: 4, kind: output, shape index: {}]
  %s5 = sld [smem:[#allocation0]]
  $region34: #{_forward_padded.1} parent=0
    _
  %s7 = ssub.s32 1, %s5
  %s8 = scalar_select 0, %s7, %s5
  %9 = sst [smem:[#allocation2]] %s3
  $region1: #{_forward_padded.1} parent=0
    #allocation3 [shape = 'u8[4096]{0}', space=vmem, size = 0x1000, scoped, tag = 'input window, operand 0, single buffered']
    #allocation4 [shape = 's32[1]{0}', space=sflag, size = 0x4, scoped, tag = 'scoped memory for _forward_padded.1']
    #allocation5 [shape = 's32[1]{0}', space=sflag, size = 0x4, scoped, tag = 'scoped memory for _forward_padded.1']
    #allocation6 [shape = 'u8[16384]{0}', space=vmem, size = 0x4000, scoped, tag = 'input window, operand 1, single buffered']
    #allocation7 [shape = 's32[1]{0}', space=sflag, size = 0x4, scoped, tag = 'scoped memory for _forward_padded.1']
    #allocation8 [shape = 'u8[4096]{0}', space=vmem, size = 0x1000, scoped, tag = 'output window, operand 0, single buffered']
    %10 = vsyncpa [#allocation4], 0
    %11 = vsyncpa [#allocation7], 0
    %12 = vsyncpa [#allocation5], 0
    // Predicated region
    $region2: #{_forward_padded.1} parent=1 // pred_check
      _
    $region3: #{_forward_padded.1} parent=1 // pred_check_branch
      %14 = sbr.rel (0) target = $region5
    $region4: #{_forward_padded.1} parent=1 // pred_region
      %s16 = ssub.s32 128, 128
      %17 = vsyncadd [#allocation4], %s16
      %s19 = sshll.u32 [#allocation3], 4
      %s20 = int_to_ptr.vmem [resolvable:$true] %s19
      %22 = dma.hbm_to_vmem [thread:$0]  %s0, 128, %s20, [#allocation4]
    $region5: #{_forward_padded.1} parent=1 // pred_fallthru
      _
    // Predicated region
    $region6: #{_forward_padded.1} parent=1 // pred_check
      _
    $region7: #{_forward_padded.1} parent=1 // pred_check_branch
      %24 = sbr.rel (0) target = $region9
    $region8: #{_forward_padded.1} parent=1 // pred_region
      %s26 = ssub.s32 512, 512
      %27 = vsyncadd [#allocation7], %s26
      %s28 = sshll.u32 [#allocation6], 4
      %s29 = int_to_ptr.vmem [resolvable:$true] %s28
      %34 = dma.hbm_to_vmem [thread:$0]  %s1, 512, %s29, [#allocation7], 128, 128, 8
    $region9: #{_forward_padded.1} parent=1 // pred_fallthru
      _
    // Predicated region
    $region10: #{_forward_padded.1} parent=1 // pred_check
      _
    $region11: #{_forward_padded.1} parent=1 // pred_check_branch
      %36 = sbr.rel (0) target = $region13
    $region12: #{_forward_padded.1} parent=1 // pred_region
      _
    $region13: #{_forward_padded.1} parent=1 // pred_fallthru
      _
    // Predicated region
    $region14: #{_forward_padded.1} parent=1 // pred_check
      _
    $region15: #{_forward_padded.1} parent=1 // pred_check_branch
      %38 = sbr.rel (0) target = $region17
    $region16: #{_forward_padded.1} parent=1 // pred_region
      _
    $region17: #{_forward_padded.1} parent=1 // pred_fallthru
      _
    // Predicated region
    $region18: #{_forward_padded.1} parent=1 // pred_check
      _
    $region19: #{_forward_padded.1} parent=1 // pred_check_branch
      %40 = sbr.rel (0) target = $region21
    $region20: #{_forward_padded.1} parent=1 // pred_region
      %41 = dma.done [#allocation4], 128
    $region21: #{_forward_padded.1} parent=1 // pred_fallthru
      _
    // Predicated region
    $region22: #{_forward_padded.1} parent=1 // pred_check
      _
    $region23: #{_forward_padded.1} parent=1 // pred_check_branch
      %43 = sbr.rel (0) target = $region25
    $region24: #{_forward_padded.1} parent=1 // pred_region
      %44 = dma.done [#allocation7], 512
    $region25: #{_forward_padded.1} parent=1 // pred_fallthru
      _
    %v45 = vld [vmem:[#allocation3] sm:$0xff]
    %v46 = vld [vmem:[#allocation6] sm:$0xff]
    %v47 = vld [vmem:[#allocation6 + $0x8] sm:$0xff]
    %v48 = vld [vmem:[#allocation6 + $0x10] sm:$0xff]
    %v49 = vld [vmem:[#allocation6 + $0x18] sm:$0xff]
    %s50 = sld [smem:[#allocation2]]
    %v51 = vld [vmem:[%s2] sm:$0x1]
    %v53 = vlaneseq
    %v54 = vshrl.u32 %v53, 7
    %v55 = vsub.s32 0, %v54
    %v56 = vrot.slane %v51, %v55
    %vm58 = vcmask 261120
    %v60 = vsel %vm58, %v45, 0
    %62 = vmatprep.subr.mxu0 0.0
    %63 = vmatpush1.msra.mxu0 %v46
    %64 = vmatprep.subr.mxu0 0.0
    %65 = vmatpush1.msra.mxu0 %v47
    %66 = vmatprep.subr.mxu0 0.0
    %67 = vmatpush1.msra.mxu0 %v48
    %68 = vmatprep.subr.mxu0 0.0
    %69 = vmatpush1.msra.mxu0 %v49
    %70 = vmatprep.subr.mxu0 0.0
    %71 = vmatpush1.msra.mxu0 0.0
    %72 = vmatprep.subr.mxu0 0.0
    %73 = vmatpush1.msra.mxu0 0.0
    %74 = vmatprep.subr.mxu0 0.0
    %75 = vmatpush1.msra.mxu0 0.0
    %76 = vmatprep.subr.mxu0 0.0
    %77 = vmatpush1.msra.mxu0 0.0
    %78 = vmatprep.subr.mxu0 0.0
    %79 = vmatpush1.msra.mxu0 0.0
    %80 = vmatprep.subr.mxu0 0.0
    %81 = vmatpush1.msra.mxu0 0.0
    %82 = vmatprep.subr.mxu0 0.0
    %83 = vmatpush1.msra.mxu0 0.0
    %84 = vmatprep.subr.mxu0 0.0
    %85 = vmatpush1.msra.mxu0 0.0
    %86 = vmatprep.subr.mxu0 0.0
    %87 = vmatpush1.msra.mxu0 0.0
    %88 = vmatprep.subr.mxu0 0.0
    %89 = vmatpush1.msra.mxu0 0.0
    %90 = vmatprep.subr.mxu0 0.0
    %91 = vmatpush1.msra.mxu0 0.0
    %92 = vmatprep.subr.mxu0 0.0
    %93 = vmatpush1.msra.mxu0 0.0
    %94 = vmatprep.subr.mxu0 0.0
    %95 = vmatpush1.msra.mxu0 0.0
    %96 = vmatprep.subr.mxu0 0.0
    %97 = vmatpush1.msra.mxu0 0.0
    %98 = vmatprep.subr.mxu0 0.0
    %99 = vmatpush1.msra.mxu0 0.0
    %100 = vmatprep.subr.mxu0 0.0
    %101 = vmatpush1.msra.mxu0 0.0
    %102 = vmatprep.subr.mxu0 0.0
    %103 = vmatpush1.msra.mxu0 0.0
    %104 = vmatprep.subr.mxu0 0.0
    %105 = vmatpush1.msra.mxu0 0.0
    %106 = vmatprep.subr.mxu0 0.0
    %107 = vmatpush1.msra.mxu0 0.0
    %108 = vmatprep.subr.mxu0 0.0
    %109 = vmatpush1.msra.mxu0 0.0
    %110 = vmatprep.subr.mxu0 0.0
    %111 = vmatpush1.msra.mxu0 0.0
    %112 = vmatprep.subr.mxu0 0.0
    %113 = vmatpush1.msra.mxu0 0.0
    %114 = vmatprep.subr.mxu0 0.0
    %115 = vmatpush1.msra.mxu0 0.0
    %116 = vmatprep.subr.mxu0 0.0
    %117 = vmatpush1.msra.mxu0 0.0
    %118 = vmatprep.subr.mxu0 0.0
    %119 = vmatpush1.msra.mxu0 0.0
    %120 = vmatprep.subr.mxu0 0.0
    %121 = vmatpush1.msra.mxu0 0.0
    %122 = vmatprep.subr.mxu0 0.0
    %123 = vmatpush1.msra.mxu0 0.0
    %124 = vmatprep.subr.mxu0 0.0
    %125 = vmatpush1.msra.mxu0 0.0
    %126 = vmatprep.mubr.f32.mxu0 0.0
    %127 = vmatmul.mubr.f32.gmra.mrb[0].mxu0 %v60
    %v128 = vpop.f32.mrb[0].mxu0
    %v129 = vadd.f32 %v56, %v128
    %v130 = vpop.f32.mrb[0].mxu0
    %131 = vdwg.mxu0
    %v132 = vstv %s50
    %v133 = vmul.f32 %v132, %v129
    %134 = vst [vmem:[#allocation8] sm:$0xff] %v133
    // Predicated region
    $region26: #{_forward_padded.1} parent=1 // pred_check
      _
    $region27: #{_forward_padded.1} parent=1 // pred_check_branch
      %136 = sbr.rel (0) target = $region29
    $region28: #{_forward_padded.1} parent=1 // pred_region
      %s138 = ssub.s32 128, 128
      %139 = vsyncadd [#allocation5], %s138
      %s141 = sshll.u32 [#allocation8], 4
      %s142 = int_to_ptr.vmem [resolvable:$true] %s141
      %144 = dma.vmem_to_hbm [thread:$0]  %s142, 128, %s4, [#allocation5]
    $region29: #{_forward_padded.1} parent=1 // pred_fallthru
      _
    // Predicated region
    $region30: #{_forward_padded.1} parent=1 // pred_check
      _
    $region31: #{_forward_padded.1} parent=1 // pred_check_branch
      %146 = sbr.rel (0) target = $region33
    $region32: #{_forward_padded.1} parent=1 // pred_region
      %147 = dma.done [#allocation5], 128
    $region33: #{_forward_padded.1} parent=1 // pred_fallthru
      _
    %148 = vsyncpa [#allocation4], 1
    %149 = vsyncpa [#allocation7], 1
    %150 = vsyncpa [#allocation5], 1

</llo_original>
